<compile_context>
chip_gen: v7x
topology: tpu7x:2x2x1
jax: 0.10.0
libtpu: 0.0.40
codegen_flags: <defaults>
</compile_context>

<pallas_src>
import math
import functools

import jax
import jax.numpy as jnp
from jax import lax
from jax.experimental import pallas as pl
from jax.experimental.pallas import tpu as pltpu

SHIFT = math.log(2.0)

# Per-step VMEM working budget used to cap the node tile (conservative vs the
# 48 MiB scoped limit we request, and vs v7x's 64 MiB physical VMEM).
_VMEM_WORK_BUDGET = 20 * 1024 * 1024


def _round_up(x, m):
    return ((x + m - 1) // m) * m


def _vmem_tile_cap(H, H2, num_graphs):
    # Approx bytes per node of tile: double-buffered bf16 features + i32 ids,
    # bf16 one-hot column (num_graphs deep), f32+bf16 h intermediates, slack.
    denom = 2 * (2 * H + 4) + 2 * num_graphs + 6 * H2 + 16
    cap = _VMEM_WORK_BUDGET // denom
    return max(128, (cap // 128) * 128)


def _cal_total_kernel(num_graphs, batch_ref, v_ref, w1_ref, b1_ref, acc_ref):
    # grid = (n_split, n_tiles); axis 0 is "parallel" (per-split partials),
    # axis 1 is "arbitrary" (node-tile reduction into the resident acc block).
    i = pl.program_id(1)

    @pl.when(i == 0)
    def _():
        acc_ref[...] = jnp.zeros_like(acc_ref)

    # lin1 (bf16 inputs, f32 accumulation) + shifted softplus in f32.
    h = jnp.dot(v_ref[...], w1_ref[...],
                preferred_element_type=jnp.float32) + b1_ref[...]
    h = jnp.logaddexp(h, 0.0) - SHIFT                       # (tile_n, H2) f32

    # Segment-sum via one-hot matmul (lane-dense ids -> plain A@B on the MXU):
    #   acc[g, :] += sum_n [batch[n] == g] * h[n, :]
    # one-hot is exact in bf16; accumulation stays f32 via preferred_element_type.
    seg = batch_ref[...]                                    # (1, tile_n) i32
    graph_ids = lax.broadcasted_iota(jnp.int32, (num_graphs, 1), 0)
    one_hot = (seg == graph_ids).astype(jnp.bfloat16)       # (G, tile_n)
    acc_ref[...] += jnp.dot(one_hot, h.astype(jnp.bfloat16),
                            preferred_element_type=jnp.float32)[None]


def cal_total_pallas(v, batch, params, num_graphs, *, tile_n=8192, n_split=1,
                     use_core_parallel=False):
    """v: [N, H] f32, batch: [N] int segment ids, params: dict of weights.

    n_split=1 is right for single-TensorCore chips (v5e/v6e).  On v7x set
    n_split=2 and use_core_parallel=True to shard the node stream across the
    two TensorCores.
    """
    N, H = v.shape
    w1, b1, w2, b2 = params["w1"], params["b1"], params["w2"], params["b2"]
    H2 = w1.shape[1]

    # Effective node tile: large for real workloads (HBM-roofline DMAs),
    # clamped for tiny N and by the VMEM working-set budget.
    per_split = -(-N // n_split)
    cap = _vmem_tile_cap(H, H2, num_graphs)
    tile_eff = max(128, min(_round_up(tile_n, 128), cap,
                            _round_up(max(per_split, 1), 128)))
    n_tiles = -(-per_split // tile_eff)
    n_pad_total = n_split * n_tiles * tile_eff
    pad = n_pad_total - N

    batch_i32 = batch.astype(jnp.int32)
    if pad:
        # padded rows: zero features + out-of-range segment id -> zero one-hot
        v = jnp.pad(v, ((0, pad), (0, 0)))
        batch_i32 = jnp.pad(batch_i32, (0, pad), constant_values=num_graphs)

    # bf16 streaming of matmul inputs; bias stays f32 (added post f32-accumulate).
    # TODO(synk): int16 batch ids would shave ~6% HBM traffic once HBM-bound.
    v_bf = v.astype(jnp.bfloat16)
    w1_bf = w1.astype(jnp.bfloat16)
    batch2d = batch_i32.reshape(1, n_pad_total)             # lane-dense ids
    b1_2d = b1.reshape(1, H2).astype(jnp.float32)

    kernel = functools.partial(_cal_total_kernel, num_graphs)

    if use_core_parallel:
        dim_sem = (pltpu.CORE_PARALLEL, pltpu.ARBITRARY)    # v7x 2-TC sharding
    else:
        dim_sem = ("parallel", "arbitrary")

    flops = 2 * n_pad_total * H * H2 + 2 * n_pad_total * num_graphs * H2
    bytes_accessed = (n_pad_total * (2 * H + 4) + H * H2 * 2 + H2 * 4
                      + n_split * num_graphs * H2 * 4)
    cost = pl.CostEstimate(flops=flops,
                           transcendentals=n_pad_total * H2,
                           bytes_accessed=bytes_accessed)

    acc = pl.pallas_call(
        kernel,
        out_shape=jax.ShapeDtypeStruct((n_split, num_graphs, H2), jnp.float32),
        grid_spec=pltpu.PrefetchScalarGridSpec(
            num_scalar_prefetch=0,
            grid=(n_split, n_tiles),
            in_specs=[
                # batch ids, lane-dense (1, tile_eff)
                pl.BlockSpec((1, tile_eff), lambda s, i: (0, s * n_tiles + i)),
                # node features (tile_eff, H)
                pl.BlockSpec((tile_eff, H), lambda s, i: (s * n_tiles + i, 0)),
                # weights / bias: constant block index -> fetched once, resident
                pl.BlockSpec((H, H2), lambda s, i: (0, 0)),
                pl.BlockSpec((1, H2), lambda s, i: (0, 0)),
            ],
            # per-split partial segment sums, resident across the node-tile axis
            out_specs=pl.BlockSpec((1, num_graphs, H2), lambda s, i: (s, 0, 0)),
        ),
        compiler_params=pltpu.CompilerParams(
            dimension_semantics=dim_sem,
            vmem_limit_bytes=48 * 1024 * 1024),
        cost_estimate=cost,
    )(batch2d, v_bf, w1_bf, b1_2d)

    acc = acc.sum(axis=0) if n_split > 1 else acc[0]        # (G, H2)

    # lin2 commuted past the segment sum (linearity):
    #   scatter(h @ W2 + b2) == scatter(h) @ W2 + counts * b2
    counts = jax.ops.segment_sum(jnp.ones((N,), jnp.float32), batch,
                                 num_segments=num_graphs)
    return acc @ w2.astype(jnp.float32) + counts[:, None] * b2.astype(jnp.float32)


def init_params(key, hidden_channels, out_channels):
    """Deterministic xavier-uniform weights, zero biases (matches reset_parameters)."""
    H, H2, C = hidden_channels, hidden_channels // 2, out_channels
    k1, k2 = jax.random.split(key)
    bound1 = math.sqrt(6.0 / (H + H2))
    bound2 = math.sqrt(6.0 / (H2 + C))
    # stored as [in, out] so the kernel does x @ W (equivalent to torch's x @ W.T)
    w1 = jax.random.uniform(k1, (H, H2), jnp.float32, -bound1, bound1)
    w2 = jax.random.uniform(k2, (H2, C), jnp.float32, -bound2, bound2)
    return {
        "w1": w1, "b1": jnp.zeros((H2,), jnp.float32),
        "w2": w2, "b2": jnp.zeros((C,), jnp.float32),
    }


def cal_total_ref_f32(v, batch, params, num_graphs):
    """Pure-f32 reference matching the original PyTorch module exactly."""
    h = jax.nn.softplus(v @ params["w1"] + params["b1"]) - SHIFT
    y = h @ params["w2"] + params["b2"]
    return jax.ops.segment_sum(y, batch, num_segments=num_graphs)


def cal_total_ref_matched(v, batch, params, num_graphs):
    """Reference with the same bf16-input / f32-accumulate numerics as the kernel."""
    h = jnp.dot(v.astype(jnp.bfloat16), params["w1"].astype(jnp.bfloat16),
                preferred_element_type=jnp.float32) + params["b1"]
    h = jnp.logaddexp(h, 0.0) - SHIFT
    s = jax.ops.segment_sum(h.astype(jnp.bfloat16).astype(jnp.float32),
                            batch, num_segments=num_graphs)
    counts = jax.ops.segment_sum(jnp.ones((v.shape[0],), jnp.float32),
                                 batch, num_segments=num_graphs)
    return s @ params["w2"] + counts[:, None] * params["b2"]


if __name__ == "__main__":
    hidden_channels = 32
    out_channels = 8

    key = jax.random.PRNGKey(0)
    kp, kv1, kv2, kv3, kb3 = jax.random.split(key, 5)
    params = init_params(kp, hidden_channels, out_channels)

    # Case 1: small, evenly divisible node count
    N1, G1 = 16, 4
    v1 = jax.random.normal(kv1, (N1, hidden_channels), jnp.float32)
    batch1 = jnp.repeat(jnp.arange(G1, dtype=jnp.int32), N1 // G1)
    u1 = jax.block_until_ready(cal_total_pallas(v1, batch1, params, G1))
    assert u1.shape == (G1, out_channels)
    assert jnp.allclose(u1, cal_total_ref_matched(v1, batch1, params, G1),
                        atol=1e-3, rtol=1e-3)
    assert jnp.allclose(u1, cal_total_ref_f32(v1, batch1, params, G1),
                        atol=5e-2, rtol=5e-2)

    # Case 2: ragged node count (exercises padding + out-of-range pad ids)
    N2, G2 = 50, 3
    v2 = jax.random.normal(kv2, (N2, hidden_channels), jnp.float32)
    batch2 = jnp.sort(jax.random.randint(kv2, (N2,), 0, G2)).astype(jnp.int32)
    u2 = jax.block_until_ready(cal_total_pallas(v2, batch2, params, G2))
    assert u2.shape == (G2, out_channels)
    assert jnp.allclose(u2, cal_total_ref_matched(v2, batch2, params, G2),
                        atol=1e-3, rtol=1e-3)
    assert jnp.allclose(u2, cal_total_ref_f32(v2, batch2, params, G2),
                        atol=5e-2, rtol=5e-2)

    # Case 3: multi-tile accumulation + 2-way split partials (small tile forced)
    N3, G3 = 300, 5
    v3 = jax.random.normal(kv3, (N3, hidden_channels), jnp.float32)
    batch3 = jnp.sort(jax.random.randint(kb3, (N3,), 0, G3)).astype(jnp.int32)
    u3 = jax.block_until_ready(
        cal_total_pallas(v3, batch3, params, G3, tile_n=128, n_split=2))
    assert u3.shape == (G3, out_channels)
    assert jnp.allclose(u3, cal_total_ref_matched(v3, batch3, params, G3),
                        atol=1e-3, rtol=1e-3)
    assert jnp.allclose(u3, cal_total_ref_f32(v3, batch3, params, G3),
                        atol=5e-2, rtol=5e-2)

    print("KERNEL_OK")
</pallas_src>

<mosaic_0001>
module attributes {stable_mosaic.version = 11 : i64} {
  func.func @_cal_total_kernel(%arg0: i32, %arg1: i32, %arg2: memref<1x128xi32, #tpu.memory_space<vmem>>, %arg3: memref<128x32xbf16, #tpu.memory_space<vmem>>, %arg4: memref<32x16xbf16, #tpu.memory_space<vmem>>, %arg5: memref<1x16xf32, #tpu.memory_space<vmem>>, %arg6: memref<1x4x16xf32, #tpu.memory_space<vmem>>) attributes {dimension_semantics = [#tpu.dimension_semantics<parallel>, #tpu.dimension_semantics<arbitrary>], iteration_bounds = array<i64: 1, 1>, scalar_prefetch = 0 : i64, scratch_operands = 0 : i64, tpu.core_type = #tpu.core_type<tc>, window_params = [{transform_indices = @transform_0, window_bounds = array<i64: 1, 128>}, {transform_indices = @transform_1, window_bounds = array<i64: 128, 32>}, {pipeline_mode = #tpu.pipeline_mode<synchronous>, transform_indices = @transform_2, window_bounds = array<i64: 32, 16>}, {pipeline_mode = #tpu.pipeline_mode<synchronous>, transform_indices = @transform_3, window_bounds = array<i64: 1, 16>}, {transform_indices = @transform_4, window_bounds = array<i64: 1, 4, 16>}]} {
    %c0_i32 = arith.constant 0 : i32
    %0 = arith.cmpi eq, %arg1, %c0_i32 : i32
    %1 = arith.extui %0 : i1 to i32
    %c0_i32_0 = arith.constant 0 : i32
    %2 = arith.cmpi ne, %1, %c0_i32_0 : i32
    scf.if %2 {
      %cst_18 = arith.constant 0.000000e+00 : f32
      %39 = vector.broadcast %cst_18 : f32 to vector<1x4x16xf32>
      %c0_19 = arith.constant 0 : index
      %c0_20 = arith.constant 0 : index
      %c0_21 = arith.constant 0 : index
      %40 = vector.load %arg6[%c0_19, %c0_20, %c0_21] : memref<1x4x16xf32, #tpu.memory_space<vmem>>, vector<1x4x16xf32>
      tpu.vector_store %arg6[%c0_19, %c0_20, %c0_21], %39 {strides = array<i32>} : memref<1x4x16xf32, #tpu.memory_space<vmem>>, vector<1x4x16xf32>,
    } else {
    }
    %c0 = arith.constant 0 : index
    %c0_1 = arith.constant 0 : index
    %3 = vector.load %arg3[%c0, %c0_1] : memref<128x32xbf16, #tpu.memory_space<vmem>>, vector<128x32xbf16>
    %c0_2 = arith.constant 0 : index
    %c0_3 = arith.constant 0 : index
    %4 = vector.load %arg4[%c0_2, %c0_3] : memref<32x16xbf16, #tpu.memory_space<vmem>>, vector<32x16xbf16>
    %cst = arith.constant dense<0.000000e+00> : vector<128x16xf32>
    %5 = tpu.matmul %3, %4, %cst {dimension_numbers = #tpu.dot_dimension_numbers<[1], [0], [0], [1], [0, 0, 1, 1], [], []>} : vector<128x32xbf16>, vector<32x16xbf16>, vector<128x16xf32> -> vector<128x16xf32>
    %c0_4 = arith.constant 0 : index
    %c0_5 = arith.constant 0 : index
    %6 = vector.load %arg5[%c0_4, %c0_5] : memref<1x16xf32, #tpu.memory_space<vmem>>, vector<1x16xf32>
    %7 = vector.broadcast %6 : vector<1x16xf32> to vector<128x16xf32>
    %8 = arith.addf %5, %7 : vector<128x16xf32>
    %cst_6 = arith.constant 0.000000e+00 : f32
    %9 = vector.broadcast %cst_6 : f32 to vector<128x16xf32>
    %10 = arith.maximumf %8, %9 : vector<128x16xf32>
    %11 = vector.broadcast %cst_6 : f32 to vector<128x16xf32>
    %12 = arith.subf %8, %11 : vector<128x16xf32>
    %13 = arith.cmpf one, %12, %12 : vector<128x16xf32>
    %14 = vector.broadcast %cst_6 : f32 to vector<128x16xf32>
    %15 = arith.addf %8, %14 : vector<128x16xf32>
    %16 = math.absf %12 : vector<128x16xf32>
    %cst_7 = arith.constant 0.000000e+00 : f32
    %17 = vector.broadcast %cst_7 : f32 to vector<128x16xf32>
    %18 = arith.subf %17, %16 : vector<128x16xf32>
    %19 = math.exp %18 : vector<128x16xf32>
    %20 = math.log1p %19 : vector<128x16xf32>
    %21 = arith.addf %10, %20 : vector<128x16xf32>
    %22 = arith.select %13, %15, %21 : vector<128x16xi1>, vector<128x16xf32>
    %cst_8 = arith.constant 0.693147182 : f32
    %23 = vector.broadcast %cst_8 : f32 to vector<128x16xf32>
    %24 = arith.subf %22, %23 : vector<128x16xf32>
    %c0_9 = arith.constant 0 : index
    %c0_10 = arith.constant 0 : index
    %25 = vector.load %arg2[%c0_9, %c0_10] : memref<1x128xi32, #tpu.memory_space<vmem>>, vector<1x128xi32>
    %26 = tpu.iota {dimensions = array<i32: 0>} : vector<4x1xi32>
    %27 = vector.broadcast %25 : vector<1x128xi32> to vector<4x128xi32>
    %28 = vector.broadcast %26 : vector<4x1xi32> to vector<4x128xi32>
    %29 = arith.cmpi eq, %27, %28 : vector<4x128xi32>
    %30 = arith.extui %29 : vector<4x128xi1> to vector<4x128xi32>
    %31 = arith.sitofp %30 : vector<4x128xi32> to vector<4x128xf32>
    %32 = arith.truncf %31 : vector<4x128xf32> to vector<4x128xbf16>
    %c0_11 = arith.constant 0 : index
    %c0_12 = arith.constant 0 : index
    %c0_13 = arith.constant 0 : index
    %33 = vector.load %arg6[%c0_11, %c0_12, %c0_13] : memref<1x4x16xf32, #tpu.memory_space<vmem>>, vector<1x4x16xf32>
    %34 = arith.truncf %24 : vector<128x16xf32> to vector<128x16xbf16>
    %cst_14 = arith.constant dense<0.000000e+00> : vector<4x16xf32>
    %35 = tpu.matmul %32, %34, %cst_14 {dimension_numbers = #tpu.dot_dimension_numbers<[1], [0], [0], [1], [0, 0, 1, 1], [], []>} : vector<4x128xbf16>, vector<128x16xbf16>, vector<4x16xf32> -> vector<4x16xf32>
    %36 = vector.shape_cast %35 : vector<4x16xf32> to vector<1x4x16xf32>
    %37 = arith.addf %33, %36 : vector<1x4x16xf32>
    %c0_15 = arith.constant 0 : index
    %c0_16 = arith.constant 0 : index
    %c0_17 = arith.constant 0 : index
    %38 = vector.load %arg6[%c0_15, %c0_16, %c0_17] : memref<1x4x16xf32, #tpu.memory_space<vmem>>, vector<1x4x16xf32>
    tpu.vector_store %arg6[%c0_15, %c0_16, %c0_17], %37 {strides = array<i32>} : memref<1x4x16xf32, #tpu.memory_space<vmem>>, vector<1x4x16xf32>,
    return
  }
  func.func @transform_0(%arg0: i32, %arg1: i32) -> (i32, i32) {
    %c1_i32 = arith.constant 1 : i32
    %0 = arith.muli %arg0, %c1_i32 : i32
    %1 = arith.addi %0, %arg1 : i32
    %c0_i32 = arith.constant 0 : i32
    %c0_i32_0 = arith.constant 0 : i32
    return %c0_i32, %1 : i32, i32
  }
  func.func @transform_1(%arg0: i32, %arg1: i32) -> (i32, i32) {
    %c1_i32 = arith.constant 1 : i32
    %0 = arith.muli %arg0, %c1_i32 : i32
    %1 = arith.addi %0, %arg1 : i32
    %c0_i32 = arith.constant 0 : i32
    %c0_i32_0 = arith.constant 0 : i32
    return %1, %c0_i32 : i32, i32
  }
  func.func @transform_2(%arg0: i32, %arg1: i32) -> (i32, i32) {
    %c0_i32 = arith.constant 0 : i32
    %c0_i32_0 = arith.constant 0 : i32
    %c0_i32_1 = arith.constant 0 : i32
    return %c0_i32, %c0_i32_0 : i32, i32
  }
  func.func @transform_3(%arg0: i32, %arg1: i32) -> (i32, i32) {
    %c0_i32 = arith.constant 0 : i32
    %c0_i32_0 = arith.constant 0 : i32
    %c0_i32_1 = arith.constant 0 : i32
    return %c0_i32, %c0_i32_0 : i32, i32
  }
  func.func @transform_4(%arg0: i32, %arg1: i32) -> (i32, i32, i32) {
    %c0_i32 = arith.constant 0 : i32
    %c0_i32_0 = arith.constant 0 : i32
    %c0_i32_1 = arith.constant 0 : i32
    return %arg0, %c0_i32, %c0_i32_0 : i32, i32, i32
  }
}

</mosaic_0001>

<llo_original>
// kernel: tpu_custom_call.1
$region0: #{tpu_custom_call.1}
  #allocation0 [shape = 'u32[]', space=smem, size = 0x4, offset = 0x4, fixed_abs, tag = 'smem constant byte address 0x4 - core index']
  #allocation1 [shape = 'u32[144,128]{1,0:T(1,128)}', space=vmem, size = 0x12000, scoped, tag = 'internal scratch']
  %s0 = inlined_call_operand.vmem [shape: s32[1,128], index: 0, kind: input, shape index: {}]
  %s1 = inlined_call_operand.vmem [shape: bf16[128,32], index: 1, kind: input, shape index: {}]
  %s2 = inlined_call_operand.vmem [shape: bf16[32,16], index: 2, kind: input, shape index: {}]
  %s3 = inlined_call_operand.vmem [shape: f32[1,16], index: 3, kind: input, shape index: {}]
  %s4 = inlined_call_operand.hbm [shape: f32[1,4,16], index: 4, kind: output, shape index: {}]
  %s5 = sld [smem:[#allocation0]]
  $region30: #{tpu_custom_call.1} parent=0
    _
  %s7 = ssub.s32 1, %s5
  %s8 = scalar_select 0, %s7, %s5
  $region1: #{tpu_custom_call.1} parent=0
    #allocation2 [shape = 'u8[2048]{0}', space=vmem, size = 0x800, scoped, tag = 'output window, operand 0, single buffered']
    #allocation3 [shape = 's32[1]{0}', space=sflag, size = 0x4, scoped, tag = 'scoped memory for tpu_custom_call.1']
    %9 = vsyncpa [#allocation3], 0
    // Predicated region
    $region2: #{tpu_custom_call.1} parent=1 // pred_check
      _
    $region3: #{tpu_custom_call.1} parent=1 // pred_check_branch
      %11 = sbr.rel (0) target = $region5
    $region4: #{tpu_custom_call.1} parent=1 // pred_region
      %s12 = sadd.s32 0, 0
      %p13 = scmp.lt.s32.totalorder %s12, 0
      %s14 = scalar_select %p13, %s12, 0
      %s15 = scalar_lea.vmem %s0, %s14
      %s16 = sadd.s32 0, 0
    $region5: #{tpu_custom_call.1} parent=1 // pred_fallthru
      _
    // Predicated region
    $region6: #{tpu_custom_call.1} parent=1 // pred_check
      _
    $region7: #{tpu_custom_call.1} parent=1 // pred_check_branch
      %18 = sbr.rel (0) target = $region9
    $region8: #{tpu_custom_call.1} parent=1 // pred_region
      %s19 = sadd.s32 0, 0
      %s20 = smul.u32 16, %s19
      %p21 = scmp.lt.s32.totalorder %s20, 15
      %s22 = scalar_select %p21, %s20, 15
      %s23 = smul.addr %s22, 4
      %s24 = scalar_lea.vmem %s1, %s23
      %s25 = sadd.s32 0, 0
      %s26 = smul.u32 16, %s25
    $region9: #{tpu_custom_call.1} parent=1 // pred_fallthru
      _
    // Predicated region
    $region10: #{tpu_custom_call.1} parent=1 // pred_check
      _
    $region11: #{tpu_custom_call.1} parent=1 // pred_check_branch
      %28 = sbr.rel (0) target = $region13
    $region12: #{tpu_custom_call.1} parent=1 // pred_region
      _
    $region13: #{tpu_custom_call.1} parent=1 // pred_fallthru
      _
    // Predicated region
    $region14: #{tpu_custom_call.1} parent=1 // pred_check
      _
    $region15: #{tpu_custom_call.1} parent=1 // pred_check_branch
      %30 = sbr.rel (0) target = $region17
    $region16: #{tpu_custom_call.1} parent=1 // pred_region
      _
    $region17: #{tpu_custom_call.1} parent=1 // pred_fallthru
      _
    %s31 = sadd.s32 0, 0
    %p32 = scmp.lt.s32.totalorder %s31, 0
    %s33 = scalar_select %p32, %s31, 0
    %s34 = scalar_lea.vmem %s0, %s33
    %s35 = sadd.s32 0, 0
    %s36 = smul.u32 16, %s35
    %p37 = scmp.lt.s32.totalorder %s36, 15
    %s38 = scalar_select %p37, %s36, 15
    %s39 = smul.addr %s38, 4
    %s40 = scalar_lea.vmem %s1, %s39
    %s41 = sadd.s32 0, 0
    %p42 = scmp.lt.s32.totalorder %s41, 0
    %s43 = scalar_select %p42, %s41, 0
    %s44 = scalar_lea.vmem %s0, %s43
    %s45 = sadd.s32 0, 0
    %s46 = sadd.s32 0, 0
    %s47 = smul.u32 16, %s46
    %p48 = scmp.lt.s32.totalorder %s47, 15
    %s49 = scalar_select %p48, %s47, 15
    %s50 = smul.addr %s49, 4
    %s51 = scalar_lea.vmem %s1, %s50
    %s52 = sadd.s32 0, 0
    %s53 = smul.u32 16, %s52
    %p55 = scmp.eq.s32.totalorder 0, 0
    // Predicated region
    $region18: #{tpu_custom_call.1} parent=1 // pred_check
      %p56 = pneg %p55
    $region19: #{tpu_custom_call.1} parent=1 // pred_check_branch
      %58 = sbr.rel (%p56) target = $region21
    $region20: #{tpu_custom_call.1} parent=1 // pred_region
      %vm59 = vcmask 125952
      %60 = vst.msk [vmem:[#allocation2] sm:$0xf] %vm59, 0.0
    $region21: #{tpu_custom_call.1} parent=1 // pred_fallthru
      _
    %v61 = vld [vmem:[%s51] sm:$0xf]
    %v62 = vld [vmem:[%s51 + $0x4] sm:$0xf]
    %v63 = vld [vmem:[%s51 + $0x8] sm:$0xf]
    %v64 = vld [vmem:[%s51 + $0xc] sm:$0xf]
    %v65 = vld [vmem:[%s51 + $0x10] sm:$0xf]
    %v66 = vld [vmem:[%s51 + $0x14] sm:$0xf]
    %v67 = vld [vmem:[%s51 + $0x18] sm:$0xf]
    %v68 = vld [vmem:[%s51 + $0x1c] sm:$0xf]
    %v69 = vld [vmem:[%s51 + $0x20] sm:$0xf]
    %v70 = vld [vmem:[%s51 + $0x24] sm:$0xf]
    %v71 = vld [vmem:[%s51 + $0x28] sm:$0xf]
    %v72 = vld [vmem:[%s51 + $0x2c] sm:$0xf]
    %v73 = vld [vmem:[%s51 + $0x30] sm:$0xf]
    %v74 = vld [vmem:[%s51 + $0x34] sm:$0xf]
    %v75 = vld [vmem:[%s51 + $0x38] sm:$0xf]
    %v76 = vld [vmem:[%s51 + $0x3c] sm:$0xf]
    %v77 = vld [vmem:[%s2] sm:$0xf]
    %v78 = vld [vmem:[%s2 + $0x4] sm:$0xf]
    %v79 = vld [vmem:[%s2 + $0x8] sm:$0xf]
    %v80 = vld [vmem:[%s2 + $0xc] sm:$0xf]
    %v81 = vld [vmem:[%s3] sm:$0x1]
    %v83 = vlaneseq
    %v84 = vshrl.u32 %v83, 7
    %v85 = vsub.s32 0, %v84
    %v86 = vrot.slane %v81, %v85
    %v104 = vunpack.c.l.b16 %v61
    %v105 = vunpack.c.l.b16 %v62
    %v106 = vunpack.c.l.b16 %v63
    %v107 = vunpack.c.l.b16 %v64
    %v108 = vunpack.c.l.b16 %v65
    %v109 = vunpack.c.l.b16 %v66
    %v110 = vunpack.c.l.b16 %v67
    %v111 = vunpack.c.l.b16 %v68
    %v112 = vunpack.c.l.b16 %v69
    %v113 = vunpack.c.l.b16 %v70
    %v114 = vunpack.c.l.b16 %v71
    %v115 = vunpack.c.l.b16 %v72
    %v116 = vunpack.c.l.b16 %v73
    %v117 = vunpack.c.l.b16 %v74
    %v118 = vunpack.c.l.b16 %v75
    %v119 = vunpack.c.l.b16 %v76
    %v120 = vpack.c.b16 %v105, %v104
    %v121 = vpack.c.b16 %v107, %v106
    %v122 = vpack.c.b16 %v109, %v108
    %v123 = vpack.c.b16 %v111, %v110
    %v124 = vpack.c.b16 %v113, %v112
    %v125 = vpack.c.b16 %v115, %v114
    %v126 = vpack.c.b16 %v117, %v116
    %v127 = vpack.c.b16 %v119, %v118
    %v132 = vunpack.c.l.b16 %v77
    %v133 = vunpack.c.l.b16 %v78
    %v134 = vunpack.c.l.b16 %v79
    %v135 = vunpack.c.l.b16 %v80
    %v136 = vpack.c.b16 %v133, %v132
    %v137 = vpack.c.b16 %v135, %v134
    %vm140 = vcmask 261120
    %v142 = vsel %vm140, %v120, 0
    %v145 = vsel %vm140, %v121, 0
    %v148 = vsel %vm140, %v122, 0
    %v151 = vsel %vm140, %v123, 0
    %v154 = vsel %vm140, %v124, 0
    %v157 = vsel %vm140, %v125, 0
    %v160 = vsel %vm140, %v126, 0
    %v163 = vsel %vm140, %v127, 0
    %165 = vmatprep.subr.bf16.mxu0 0
    %166 = vmatpush1.bf16.msra.mxu0 %v136
    %167 = vmatprep.subr.bf16.mxu0 0
    %168 = vmatpush1.bf16.msra.mxu0 %v137
    %169 = vmatprep.subr.bf16.mxu0 0
    %170 = vmatpush1.bf16.msra.mxu0 0
    %171 = vmatprep.subr.bf16.mxu0 0
    %172 = vmatpush1.bf16.msra.mxu0 0
    %173 = vmatprep.subr.bf16.mxu0 0
    %174 = vmatpush1.bf16.msra.mxu0 0
    %175 = vmatprep.subr.bf16.mxu0 0
    %176 = vmatpush1.bf16.msra.mxu0 0
    %177 = vmatprep.subr.bf16.mxu0 0
    %178 = vmatpush1.bf16.msra.mxu0 0
    %179 = vmatprep.subr.bf16.mxu0 0
    %180 = vmatpush1.bf16.msra.mxu0 0
    %181 = vmatprep.subr.bf16.mxu0 0
    %182 = vmatpush1.bf16.msra.mxu0 0
    %183 = vmatprep.subr.bf16.mxu0 0
    %184 = vmatpush1.bf16.msra.mxu0 0
    %185 = vmatprep.subr.bf16.mxu0 0
    %186 = vmatpush1.bf16.msra.mxu0 0
    %187 = vmatprep.subr.bf16.mxu0 0
    %188 = vmatpush1.bf16.msra.mxu0 0
    %189 = vmatprep.subr.bf16.mxu0 0
    %190 = vmatpush1.bf16.msra.mxu0 0
    %191 = vmatprep.subr.bf16.mxu0 0
    %192 = vmatpush1.bf16.msra.mxu0 0
    %193 = vmatprep.subr.bf16.mxu0 0
    %194 = vmatpush1.bf16.msra.mxu0 0
    %195 = vmatprep.subr.bf16.mxu0 0
    %196 = vmatpush1.bf16.msra.mxu0 0
    %197 = vmatprep.mubr.bf16.mxu0 0
    %198 = vmatmul.mubr.bf16.gmra.mrb[0].mxu0 %v142
    %v199 = vpop.f32.mrb[0].mxu0
    %v200 = vadd.f32 %v86, %v199
    %v201 = vpop.f32.mrb[0].mxu0
    %v202 = vpop.f32.mrb[0].mxu0
    %v203 = vadd.f32 %v86, %v202
    %v204 = vpop.f32.mrb[0].mxu0
    %205 = vmatprep.mubr.bf16.mxu0 0
    %206 = vmatmul.mubr.bf16.gmra.mrb[0].mxu0 %v145
    %v207 = vpop.f32.mrb[0].mxu0
    %v208 = vadd.f32 %v86, %v207
    %v209 = vpop.f32.mrb[0].mxu0
    %v210 = vpop.f32.mrb[0].mxu0
    %v211 = vadd.f32 %v86, %v210
    %v212 = vpop.f32.mrb[0].mxu0
    %213 = vmatprep.mubr.bf16.mxu0 0
    %214 = vmatmul.mubr.bf16.gmra.mrb[0].mxu0 %v148
    %v215 = vpop.f32.mrb[0].mxu0
    %v216 = vadd.f32 %v86, %v215
    %v217 = vpop.f32.mrb[0].mxu0
    %v218 = vpop.f32.mrb[0].mxu0
    %v219 = vadd.f32 %v86, %v218
    %v220 = vpop.f32.mrb[0].mxu0
    %221 = vmatprep.mubr.bf16.mxu0 0
    %222 = vmatmul.mubr.bf16.gmra.mrb[0].mxu0 %v151
    %v223 = vpop.f32.mrb[0].mxu0
    %v224 = vadd.f32 %v86, %v223
    %v225 = vpop.f32.mrb[0].mxu0
    %v226 = vpop.f32.mrb[0].mxu0
    %v227 = vadd.f32 %v86, %v226
    %v228 = vpop.f32.mrb[0].mxu0
    %229 = vmatprep.mubr.bf16.mxu0 0
    %230 = vmatmul.mubr.bf16.gmra.mrb[0].mxu0 %v154
    %v231 = vpop.f32.mrb[0].mxu0
    %v232 = vadd.f32 %v86, %v231
    %v233 = vpop.f32.mrb[0].mxu0
    %v234 = vpop.f32.mrb[0].mxu0
    %v235 = vadd.f32 %v86, %v234
    %v236 = vpop.f32.mrb[0].mxu0
    %237 = vmatprep.mubr.bf16.mxu0 0
    %238 = vmatmul.mubr.bf16.gmra.mrb[0].mxu0 %v157
    %v239 = vpop.f32.mrb[0].mxu0
    %v240 = vadd.f32 %v86, %v239
    %v241 = vpop.f32.mrb[0].mxu0
    %v242 = vpop.f32.mrb[0].mxu0
    %v243 = vadd.f32 %v86, %v242
    %v244 = vpop.f32.mrb[0].mxu0
    %245 = vmatprep.mubr.bf16.mxu0 0
    %246 = vmatmul.mubr.bf16.gmra.mrb[0].mxu0 %v160
    %v247 = vpop.f32.mrb[0].mxu0
    %v248 = vadd.f32 %v86, %v247
    %v249 = vpop.f32.mrb[0].mxu0
    %v250 = vpop.f32.mrb[0].mxu0
    %v251 = vadd.f32 %v86, %v250
    %v252 = vpop.f32.mrb[0].mxu0
    %253 = vmatprep.mubr.bf16.mxu0 0
    %254 = vmatmul.mubr.bf16.gmra.mrb[0].mxu0 %v163
    %v255 = vpop.f32.mrb[0].mxu0
    %v256 = vadd.f32 %v86, %v255
    %v257 = vpop.f32.mrb[0].mxu0
    %v258 = vpop.f32.mrb[0].mxu0
    %v259 = vadd.f32 %v86, %v258
    %v260 = vpop.f32.mrb[0].mxu0
    %261 = vdwg.mxu0
    %v262 = vmax.f32 %v200, 0.0
    %v263 = vmax.f32 %v203, 0.0
    %v264 = vmax.f32 %v208, 0.0
    %v265 = vmax.f32 %v211, 0.0
    %v266 = vmax.f32 %v216, 0.0
    %v267 = vmax.f32 %v219, 0.0
    %v268 = vmax.f32 %v224, 0.0
    %v269 = vmax.f32 %v227, 0.0
    %v270 = vmax.f32 %v232, 0.0
    %v271 = vmax.f32 %v235, 0.0
    %v272 = vmax.f32 %v240, 0.0
    %v273 = vmax.f32 %v243, 0.0
    %v274 = vmax.f32 %v248, 0.0
    %v275 = vmax.f32 %v251, 0.0
    %v276 = vmax.f32 %v256, 0.0
    %v277 = vmax.f32 %v259, 0.0
    %vm278 = vcmp.ne.f32.partialorder %v200, %v200
    %vm279 = vcmp.ne.f32.partialorder %v203, %v203
    %vm280 = vcmp.ne.f32.partialorder %v208, %v208
    %vm281 = vcmp.ne.f32.partialorder %v211, %v211
    %vm282 = vcmp.ne.f32.partialorder %v216, %v216
    %vm283 = vcmp.ne.f32.partialorder %v219, %v219
    %vm284 = vcmp.ne.f32.partialorder %v224, %v224
    %vm285 = vcmp.ne.f32.partialorder %v227, %v227
    %vm286 = vcmp.ne.f32.partialorder %v232, %v232
    %vm287 = vcmp.ne.f32.partialorder %v235, %v235
    %vm288 = vcmp.ne.f32.partialorder %v240, %v240
    %vm289 = vcmp.ne.f32.partialorder %v243, %v243
    %vm290 = vcmp.ne.f32.partialorder %v248, %v248
    %vm291 = vcmp.ne.f32.partialorder %v251, %v251
    %vm292 = vcmp.ne.f32.partialorder %v256, %v256
    %vm293 = vcmp.ne.f32.partialorder %v259, %v259
    %v294 = vadd.f32 %v200, 0.0
    %v295 = vadd.f32 %v203, 0.0
    %v296 = vadd.f32 %v208, 0.0
    %v297 = vadd.f32 %v211, 0.0
    %v298 = vadd.f32 %v216, 0.0
    %v299 = vadd.f32 %v219, 0.0
    %v300 = vadd.f32 %v224, 0.0
    %v301 = vadd.f32 %v227, 0.0
    %v302 = vadd.f32 %v232, 0.0
    %v303 = vadd.f32 %v235, 0.0
    %v304 = vadd.f32 %v240, 0.0
    %v305 = vadd.f32 %v243, 0.0
    %v306 = vadd.f32 %v248, 0.0
    %v307 = vadd.f32 %v251, 0.0
    %v308 = vadd.f32 %v256, 0.0
    %v309 = vadd.f32 %v259, 0.0
    %v310 = vand.u32 2147483647, %v200
    %v311 = vand.u32 2147483647, %v203
    %v312 = vand.u32 2147483647, %v208
    %v313 = vand.u32 2147483647, %v211
    %v314 = vand.u32 2147483647, %v216
    %v315 = vand.u32 2147483647, %v219
    %v316 = vand.u32 2147483647, %v224
    %v317 = vand.u32 2147483647, %v227
    %v318 = vand.u32 2147483647, %v232
    %v319 = vand.u32 2147483647, %v235
    %v320 = vand.u32 2147483647, %v240
    %v321 = vand.u32 2147483647, %v243
    %v322 = vand.u32 2147483647, %v248
    %v323 = vand.u32 2147483647, %v251
    %v324 = vand.u32 2147483647, %v256
    %v325 = vand.u32 2147483647, %v259
    %v326 = vsub.f32 0.0, %v310
    %v327 = vsub.f32 0.0, %v311
    %v328 = vsub.f32 0.0, %v312
    %v329 = vsub.f32 0.0, %v313
    %v330 = vsub.f32 0.0, %v314
    %v331 = vsub.f32 0.0, %v315
    %v332 = vsub.f32 0.0, %v316
    %v333 = vsub.f32 0.0, %v317
    %v334 = vsub.f32 0.0, %v318
    %v335 = vsub.f32 0.0, %v319
    %v336 = vsub.f32 0.0, %v320
    %v337 = vsub.f32 0.0, %v321
    %v338 = vsub.f32 0.0, %v322
    %v339 = vsub.f32 0.0, %v323
    %v340 = vsub.f32 0.0, %v324
    %v341 = vsub.f32 0.0, %v325
    %v342 = vmul.f32 %v326, 1.442695
    %v343 = vpow.pop %v342
    %v344 = vmul.f32 %v327, 1.442695
    %v345 = vpow.pop %v344
    %v346 = vmul.f32 %v328, 1.442695
    %v347 = vpow.pop %v346
    %v348 = vmul.f32 %v329, 1.442695
    %v349 = vpow.pop %v348
    %v350 = vmul.f32 %v330, 1.442695
    %v351 = vpow.pop %v350
    %v352 = vmul.f32 %v331, 1.442695
    %v353 = vpow.pop %v352
    %v354 = vmul.f32 %v332, 1.442695
    %v355 = vpow.pop %v354
    %v356 = vmul.f32 %v333, 1.442695
    %v357 = vpow.pop %v356
    %v358 = vmul.f32 %v334, 1.442695
    %v359 = vpow.pop %v358
    %v360 = vmul.f32 %v335, 1.442695
    %v361 = vpow.pop %v360
    %v362 = vmul.f32 %v336, 1.442695
    %v363 = vpow.pop %v362
    %v364 = vmul.f32 %v337, 1.442695
    %v365 = vpow.pop %v364
    %v366 = vmul.f32 %v338, 1.442695
    %v367 = vpow.pop %v366
    %v368 = vmul.f32 %v339, 1.442695
    %v369 = vpow.pop %v368
    %v370 = vmul.f32 %v340, 1.442695
    %v371 = vpow.pop %v370
    %v372 = vmul.f32 %v341, 1.442695
    %v373 = vpow.pop %v372
    %v374 = vadd.f32 %v343, 1.0
    %v375 = vlog2.pop %v374
    %v376 = vmul.f32 %v375, 0.6931472
    %v377 = vmul.f32 -0.5, %v343
    %v378 = vadd.f32 %v377, 1.0
    %v379 = vmul.f32 %v378, %v343
    %v380 = vand.u32 2147483647, %v343
    %vm381 = vcmp.lt.f32.partialorder %v380, 0.0004427343
    %v382 = vsel %vm381, %v379, %v376
    %v383 = vadd.f32 %v345, 1.0
    %v384 = vlog2.pop %v383
    %v385 = vmul.f32 %v384, 0.6931472
    %v386 = vmul.f32 -0.5, %v345
    %v387 = vadd.f32 %v386, 1.0
    %v388 = vmul.f32 %v387, %v345
    %v389 = vand.u32 2147483647, %v345
    %vm390 = vcmp.lt.f32.partialorder %v389, 0.0004427343
    %v391 = vsel %vm390, %v388, %v385
    %v392 = vadd.f32 %v347, 1.0
    %v393 = vlog2.pop %v392
    %v394 = vmul.f32 %v393, 0.6931472
    %v395 = vmul.f32 -0.5, %v347
    %v396 = vadd.f32 %v395, 1.0
    %v397 = vmul.f32 %v396, %v347
    %v398 = vand.u32 2147483647, %v347
    %vm399 = vcmp.lt.f32.partialorder %v398, 0.0004427343
    %v400 = vsel %vm399, %v397, %v394
    %v401 = vadd.f32 %v349, 1.0
    %v402 = vlog2.pop %v401
    %v403 = vmul.f32 %v402, 0.6931472
    %v404 = vmul.f32 -0.5, %v349
    %v405 = vadd.f32 %v404, 1.0
    %v406 = vmul.f32 %v405, %v349
    %v407 = vand.u32 2147483647, %v349
    %vm408 = vcmp.lt.f32.partialorder %v407, 0.0004427343
    %v409 = vsel %vm408, %v406, %v403
    %v410 = vadd.f32 %v351, 1.0
    %v411 = vlog2.pop %v410
    %v412 = vmul.f32 %v411, 0.6931472
    %v413 = vmul.f32 -0.5, %v351
    %v414 = vadd.f32 %v413, 1.0
    %v415 = vmul.f32 %v414, %v351
    %v416 = vand.u32 2147483647, %v351
    %vm417 = vcmp.lt.f32.partialorder %v416, 0.0004427343
    %v418 = vsel %vm417, %v415, %v412
    %v419 = vadd.f32 %v353, 1.0
    %v420 = vlog2.pop %v419
    %v421 = vmul.f32 %v420, 0.6931472
    %v422 = vmul.f32 -0.5, %v353
    %v423 = vadd.f32 %v422, 1.0
    %v424 = vmul.f32 %v423, %v353
    %v425 = vand.u32 2147483647, %v353
    %vm426 = vcmp.lt.f32.partialorder %v425, 0.0004427343
    %v427 = vsel %vm426, %v424, %v421
    %v428 = vadd.f32 %v355, 1.0
    %v429 = vlog2.pop %v428
    %v430 = vmul.f32 %v429, 0.6931472
    %v431 = vmul.f32 -0.5, %v355
    %v432 = vadd.f32 %v431, 1.0
    %v433 = vmul.f32 %v432, %v355
    %v434 = vand.u32 2147483647, %v355
    %vm435 = vcmp.lt.f32.partialorder %v434, 0.0004427343
    %v436 = vsel %vm435, %v433, %v430
    %v437 = vadd.f32 %v357, 1.0
    %v438 = vlog2.pop %v437
    %v439 = vmul.f32 %v438, 0.6931472
    %v440 = vmul.f32 -0.5, %v357
    %v441 = vadd.f32 %v440, 1.0
    %v442 = vmul.f32 %v441, %v357
    %v443 = vand.u32 2147483647, %v357
    %vm444 = vcmp.lt.f32.partialorder %v443, 0.0004427343
    %v445 = vsel %vm444, %v442, %v439
    %v446 = vadd.f32 %v359, 1.0
    %v447 = vlog2.pop %v446
    %v448 = vmul.f32 %v447, 0.6931472
    %v449 = vmul.f32 -0.5, %v359
    %v450 = vadd.f32 %v449, 1.0
    %v451 = vmul.f32 %v450, %v359
    %v452 = vand.u32 2147483647, %v359
    %vm453 = vcmp.lt.f32.partialorder %v452, 0.0004427343
    %v454 = vsel %vm453, %v451, %v448
    %v455 = vadd.f32 %v361, 1.0
    %v456 = vlog2.pop %v455
    %v457 = vmul.f32 %v456, 0.6931472
    %v458 = vmul.f32 -0.5, %v361
    %v459 = vadd.f32 %v458, 1.0
    %v460 = vmul.f32 %v459, %v361
    %v461 = vand.u32 2147483647, %v361
    %vm462 = vcmp.lt.f32.partialorder %v461, 0.0004427343
    %v463 = vsel %vm462, %v460, %v457
    %v464 = vadd.f32 %v363, 1.0
    %v465 = vlog2.pop %v464
    %v466 = vmul.f32 %v465, 0.6931472
    %v467 = vmul.f32 -0.5, %v363
    %v468 = vadd.f32 %v467, 1.0
    %v469 = vmul.f32 %v468, %v363
    %v470 = vand.u32 2147483647, %v363
    %vm471 = vcmp.lt.f32.partialorder %v470, 0.0004427343
    %v472 = vsel %vm471, %v469, %v466
    %v473 = vadd.f32 %v365, 1.0
    %v474 = vlog2.pop %v473
    %v475 = vmul.f32 %v474, 0.6931472
    %v476 = vmul.f32 -0.5, %v365
    %v477 = vadd.f32 %v476, 1.0
    %v478 = vmul.f32 %v477, %v365
    %v479 = vand.u32 2147483647, %v365
    %vm480 = vcmp.lt.f32.partialorder %v479, 0.0004427343
    %v481 = vsel %vm480, %v478, %v475
    %v482 = vadd.f32 %v367, 1.0
    %v483 = vlog2.pop %v482
    %v484 = vmul.f32 %v483, 0.6931472
    %v485 = vmul.f32 -0.5, %v367
    %v486 = vadd.f32 %v485, 1.0
    %v487 = vmul.f32 %v486, %v367
    %v488 = vand.u32 2147483647, %v367
    %vm489 = vcmp.lt.f32.partialorder %v488, 0.0004427343
    %v490 = vsel %vm489, %v487, %v484
    %v491 = vadd.f32 %v369, 1.0
    %v492 = vlog2.pop %v491
    %v493 = vmul.f32 %v492, 0.6931472
    %v494 = vmul.f32 -0.5, %v369
    %v495 = vadd.f32 %v494, 1.0
    %v496 = vmul.f32 %v495, %v369
    %v497 = vand.u32 2147483647, %v369
    %vm498 = vcmp.lt.f32.partialorder %v497, 0.0004427343
    %v499 = vsel %vm498, %v496, %v493
    %v500 = vadd.f32 %v371, 1.0
    %v501 = vlog2.pop %v500
    %v502 = vmul.f32 %v501, 0.6931472
    %v503 = vmul.f32 -0.5, %v371
    %v504 = vadd.f32 %v503, 1.0
    %v505 = vmul.f32 %v504, %v371
    %v506 = vand.u32 2147483647, %v371
    %vm507 = vcmp.lt.f32.partialorder %v506, 0.0004427343
    %v508 = vsel %vm507, %v505, %v502
    %v509 = vadd.f32 %v373, 1.0
    %v510 = vlog2.pop %v509
    %v511 = vmul.f32 %v510, 0.6931472
    %v512 = vmul.f32 -0.5, %v373
    %v513 = vadd.f32 %v512, 1.0
    %v514 = vmul.f32 %v513, %v373
    %v515 = vand.u32 2147483647, %v373
    %vm516 = vcmp.lt.f32.partialorder %v515, 0.0004427343
    %v517 = vsel %vm516, %v514, %v511
    %v518 = vadd.f32 %v262, %v382
    %v519 = vadd.f32 %v263, %v391
    %v520 = vadd.f32 %v264, %v400
    %v521 = vadd.f32 %v265, %v409
    %v522 = vadd.f32 %v266, %v418
    %v523 = vadd.f32 %v267, %v427
    %v524 = vadd.f32 %v268, %v436
    %v525 = vadd.f32 %v269, %v445
    %v526 = vadd.f32 %v270, %v454
    %v527 = vadd.f32 %v271, %v463
    %v528 = vadd.f32 %v272, %v472
    %v529 = vadd.f32 %v273, %v481
    %v530 = vadd.f32 %v274, %v490
    %v531 = vadd.f32 %v275, %v499
    %v532 = vadd.f32 %v276, %v508
    %v533 = vadd.f32 %v277, %v517
    %v534 = vsel %vm278, %v294, %v518
    %v535 = vsel %vm279, %v295, %v519
    %v536 = vsel %vm280, %v296, %v520
    %v537 = vsel %vm281, %v297, %v521
    %v538 = vsel %vm282, %v298, %v522
    %v539 = vsel %vm283, %v299, %v523
    %v540 = vsel %vm284, %v300, %v524
    %v541 = vsel %vm285, %v301, %v525
    %v542 = vsel %vm286, %v302, %v526
    %v543 = vsel %vm287, %v303, %v527
    %v544 = vsel %vm288, %v304, %v528
    %v545 = vsel %vm289, %v305, %v529
    %v546 = vsel %vm290, %v306, %v530
    %v547 = vsel %vm291, %v307, %v531
    %v548 = vsel %vm292, %v308, %v532
    %v549 = vsel %vm293, %v309, %v533
    %v550 = vsub.f32 %v534, 0.6931472
    %v551 = vsub.f32 %v535, 0.6931472
    %v552 = vsub.f32 %v536, 0.6931472
    %v553 = vsub.f32 %v537, 0.6931472
    %v554 = vsub.f32 %v538, 0.6931472
    %v555 = vsub.f32 %v539, 0.6931472
    %v556 = vsub.f32 %v540, 0.6931472
    %v557 = vsub.f32 %v541, 0.6931472
    %v558 = vsub.f32 %v542, 0.6931472
    %v559 = vsub.f32 %v543, 0.6931472
    %v560 = vsub.f32 %v544, 0.6931472
    %v561 = vsub.f32 %v545, 0.6931472
    %v562 = vsub.f32 %v546, 0.6931472
    %v563 = vsub.f32 %v547, 0.6931472
    %v564 = vsub.f32 %v548, 0.6931472
    %v565 = vsub.f32 %v549, 0.6931472
    %v566 = vld [vmem:[%s44] sm:$0x1]
    %v567 = vlaneseq
    %v568 = vshrl.u32 %v567, 7
    %v569 = vlaneseq
    %v570 = vshrl.u32 %v569, 7
    %v571 = vsub.s32 0, %v570
    %v572 = vrot.slane %v566, %v571
    %vm573 = vcmp.eq.s32.totalorder %v572, %v568
    %v574 = vsel %vm573, 1, 0
    %v575 = vcvt.s32.f32 %v574
    %v576 = vpack.c.bf16 %v575, %v575
    %v577 = vld [vmem:[#allocation2] sm:$0xf]
    %v578 = vpack.c.bf16 %v551, %v550
    %v579 = vpack.c.bf16 %v553, %v552
    %v580 = vpack.c.bf16 %v555, %v554
    %v581 = vpack.c.bf16 %v557, %v556
    %v582 = vpack.c.bf16 %v559, %v558
    %v583 = vpack.c.bf16 %v561, %v560
    %v584 = vpack.c.bf16 %v563, %v562
    %v585 = vpack.c.bf16 %v565, %v564
    %586 = vmatprep.subr.bf16.mxu0 0
    %587 = vmatpush1.bf16.msra.mxu0 %v578
    %588 = vmatprep.subr.bf16.mxu0 0
    %589 = vmatpush1.bf16.msra.mxu0 %v579
    %590 = vmatprep.subr.bf16.mxu0 0
    %591 = vmatpush1.bf16.msra.mxu0 %v580
    %592 = vmatprep.subr.bf16.mxu0 0
    %593 = vmatpush1.bf16.msra.mxu0 %v581
    %594 = vmatprep.subr.bf16.mxu0 0
    %595 = vmatpush1.bf16.msra.mxu0 %v582
    %596 = vmatprep.subr.bf16.mxu0 0
    %597 = vmatpush1.bf16.msra.mxu0 %v583
    %598 = vmatprep.subr.bf16.mxu0 0
    %599 = vmatpush1.bf16.msra.mxu0 %v584
    %600 = vmatprep.subr.bf16.mxu0 0
    %601 = vmatpush1.bf16.msra.mxu0 %v585
    %602 = vmatprep.subr.bf16.mxu0 0
    %603 = vmatpush1.bf16.msra.mxu0 0
    %604 = vmatprep.subr.bf16.mxu0 0
    %605 = vmatpush1.bf16.msra.mxu0 0
    %606 = vmatprep.subr.bf16.mxu0 0
    %607 = vmatpush1.bf16.msra.mxu0 0
    %608 = vmatprep.subr.bf16.mxu0 0
    %609 = vmatpush1.bf16.msra.mxu0 0
    %610 = vmatprep.subr.bf16.mxu0 0
    %611 = vmatpush1.bf16.msra.mxu0 0
    %612 = vmatprep.subr.bf16.mxu0 0
    %613 = vmatpush1.bf16.msra.mxu0 0
    %614 = vmatprep.subr.bf16.mxu0 0
    %615 = vmatpush1.bf16.msra.mxu0 0
    %616 = vmatprep.subr.bf16.mxu0 0
    %617 = vmatpush1.bf16.msra.mxu0 0
    %618 = vmatprep.mubr.bf16.mxu0 0
    %619 = vmatmul.mubr.bf16.gmra.mrb[0].mxu0 %v576
    %v620 = vpop.f32.mrb[0].mxu0
    %v621 = vadd.f32 0.0, %v620
    %v622 = vpop.f32.mrb[0].mxu0
    %v623 = vpop.f32.mrb[0].mxu0
    %v624 = vpop.f32.mrb[0].mxu0
    %625 = vdwg.mxu0
    %v626 = vadd.f32 %v577, %v621
    %vm627 = vcmask 125952
    %628 = vst.msk [vmem:[#allocation2] sm:$0xf] %vm627, %v626
    // Predicated region
    $region22: #{tpu_custom_call.1} parent=1 // pred_check
      _
    $region23: #{tpu_custom_call.1} parent=1 // pred_check_branch
      %630 = sbr.rel (0) target = $region25
    $region24: #{tpu_custom_call.1} parent=1 // pred_region
      %s632 = ssub.s32 64, 64
      %633 = vsyncadd [#allocation3], %s632
      %s635 = sshll.u32 [#allocation2], 4
      %s636 = int_to_ptr.vmem [resolvable:$true] %s635
      %638 = dma.vmem_to_hbm [thread:$0]  %s636, 64, %s4, [#allocation3]
    $region25: #{tpu_custom_call.1} parent=1 // pred_fallthru
      _
    // Predicated region
    $region26: #{tpu_custom_call.1} parent=1 // pred_check
      _
    $region27: #{tpu_custom_call.1} parent=1 // pred_check_branch
      %640 = sbr.rel (0) target = $region29
    $region28: #{tpu_custom_call.1} parent=1 // pred_region
      %641 = dma.done [#allocation3], 64
    $region29: #{tpu_custom_call.1} parent=1 // pred_fallthru
      _
    %642 = vsyncpa [#allocation3], 1

</llo_original>
